<compile_context>
chip_gen: v7x
topology: tpu7x:2x2x1
jax: 0.10.0
libtpu: 0.0.40
codegen_flags: <defaults>
</compile_context>

<pallas_src>
import jax
import jax.numpy as jnp
from jax.experimental import pallas as pl
from jax.experimental.pallas import tpu as pltpu

_IN_FEATURES = 11
_IN_PAD = 16        # layer-1 K padded to a clean sublane multiple (in-kernel)
_HIDDEN = 256
_OUT_FEATURES = 2
_OUT_PAD = 128      # layer-4 MXU matmul width (result sliced to 2 in-kernel)
_MAX_TB = 2048      # max batch tile (amortizes per-grid-step overhead)


def _elementwise_dtype():
    """bf16 bias-add/ReLU on v6e/v7x (bf16 VALU), f32 elsewhere (e.g. v5e)."""
    try:
        kind = jax.devices()[0].device_kind.lower()
    except Exception:
        return jnp.float32
    if ("v6" in kind) or ("v7" in kind) or ("tpu7" in kind):
        return jnp.bfloat16
    return jnp.float32


def _make_mlp_kernel(ew_dtype):
    """Fused forward: relu(relu(relu(x@W1+b1)@W2+b2)@W3+b3)@W4+b4.

    bf16 MXU matmuls with f32 accumulation; elementwise in `ew_dtype`
    (bf16 on v6e/v7x, f32 on v5e).  Final bias add / store stays f32.
    """

    def kernel(x_ref,
               w1_ref, b1_ref,
               w2_ref, b2_ref,
               w3_ref, b3_ref,
               w4_ref, b4_ref,
               o_ref,
               x16_ref):
        tb = x16_ref.shape[0]
        # In-kernel cast + K pad (11 -> 16).  Zero the pad lanes every tile:
        # scratch is per-core on megacore, so a program_id==0 guard would
        # leave the second core's scratch uninitialized.
        x16_ref[:, _IN_FEATURES:] = jnp.zeros(
            (tb, _IN_PAD - _IN_FEATURES), jnp.bfloat16)
        x16_ref[:, :_IN_FEATURES] = x_ref[...].astype(jnp.bfloat16)

        def layer(h, w_ref, b_ref):
            a = jnp.dot(h, w_ref[...], preferred_element_type=jnp.float32)
            return jnp.maximum(a.astype(ew_dtype) + b_ref[...], 0).astype(
                jnp.bfloat16)

        h = layer(x16_ref[...], w1_ref, b1_ref)
        h = layer(h, w2_ref, b2_ref)
        h = layer(h, w3_ref, b3_ref)

        out = jnp.dot(h, w4_ref[...], preferred_element_type=jnp.float32)
        # Narrow, f32 store: only the 2 real columns go back to HBM.
        o_ref[...] = (out[:, :_OUT_FEATURES] + b4_ref[...]).astype(o_ref.dtype)

    return kernel


def prepare_params(params, elementwise_dtype=None):
    """One-time prep: bf16 weights [in,out] with padded ragged dims, [1,out] biases."""
    if elementwise_dtype is None:
        elementwise_dtype = _elementwise_dtype()

    w1, b1 = params["lin1"]
    w2, b2 = params["lin2"]
    w3, b3 = params["lin3"]
    w4, b4 = params["lin4"]

    # Pad layer-1 K dim 11 -> 16 with zero rows (x is zero-padded in-kernel).
    w1p = jnp.zeros((_IN_PAD, _HIDDEN), jnp.bfloat16)
    w1p = w1p.at[:_IN_FEATURES, :].set(w1.astype(jnp.bfloat16))

    # Pad layer-4 output 2 -> 128 with zero columns (sliced off in-kernel
    # before the store, so only 2 columns ever hit HBM).
    w4p = jnp.zeros((_HIDDEN, _OUT_PAD), jnp.bfloat16)
    w4p = w4p.at[:, :_OUT_FEATURES].set(w4.astype(jnp.bfloat16))

    return dict(
        w1=w1p, b1=b1.astype(elementwise_dtype).reshape(1, -1),
        w2=w2.astype(jnp.bfloat16), b2=b2.astype(elementwise_dtype).reshape(1, -1),
        w3=w3.astype(jnp.bfloat16), b3=b3.astype(elementwise_dtype).reshape(1, -1),
        w4=w4p, b4=b4.astype(jnp.float32).reshape(1, _OUT_FEATURES),
    )


def _round_up(v, m):
    return -(-v // m) * m


def _choose_batch_tile(b):
    """Pick a batch tile:
    - very small batches: one tile, rounded up to a sublane multiple;
    - otherwise: >= 2 tiles (so v7x megacore can split the 'parallel' axis),
      balanced to minimize tail padding, capped at _MAX_TB.
    """
    if b <= 16:
        return max(8, _round_up(b, 8))
    n_tiles = max(2, -(-b // _MAX_TB))
    return _round_up(-(-b // n_tiles), 8)


@jax.jit
def regression_model_forward(x, prep):
    """x: [B, 11] float32. prep: output of prepare_params. Returns [B, 2] float32."""
    B = x.shape[0]
    TB = _choose_batch_tile(B)
    B_pad = _round_up(B, TB)

    x = x.astype(jnp.float32)
    if B_pad != B:
        # Only the batch dim is padded (no feature pad / cast pass in HBM).
        x = jnp.pad(x, ((0, B_pad - B), (0, 0)))

    ew_dtype = prep["b1"].dtype
    kernel = _make_mlp_kernel(ew_dtype)

    # Weights / biases: full-array blocks, constant index_map -> VMEM-resident
    # across all batch tiles (no per-tile re-DMA).
    const2d = lambda a: pl.BlockSpec(a.shape, lambda i: (0, 0))

    out = pl.pallas_call(
        kernel,
        out_shape=jax.ShapeDtypeStruct((B_pad, _OUT_FEATURES), jnp.float32),
        grid_spec=pltpu.PrefetchScalarGridSpec(
            num_scalar_prefetch=0,
            grid=(B_pad // TB,),
            in_specs=[
                pl.BlockSpec((TB, _IN_FEATURES), lambda i: (i, 0)),
                const2d(prep["w1"]), const2d(prep["b1"]),
                const2d(prep["w2"]), const2d(prep["b2"]),
                const2d(prep["w3"]), const2d(prep["b3"]),
                const2d(prep["w4"]), const2d(prep["b4"]),
            ],
            out_specs=pl.BlockSpec((TB, _OUT_FEATURES), lambda i: (i, 0)),
            scratch_shapes=[pltpu.VMEM((TB, _IN_PAD), jnp.bfloat16)],
        ),
        compiler_params=pltpu.CompilerParams(
            dimension_semantics=("parallel",),
            vmem_limit_bytes=48 * 1024 * 1024),
    )(x, prep["w1"], prep["b1"], prep["w2"], prep["b2"],
      prep["w3"], prep["b3"], prep["w4"], prep["b4"])

    return out[:B]


def init_params(key):
    """Deterministic init matching nn.Linear default ranges (uniform +-1/sqrt(fan_in))."""
    dims = [(11, 256), (256, 256), (256, 256), (256, 2)]
    names = ["lin1", "lin2", "lin3", "lin4"]
    params = {}
    for name, (fan_in, fan_out) in zip(names, dims):
        key, kw, kb = jax.random.split(key, 3)
        bound = 1.0 / jnp.sqrt(jnp.float32(fan_in))
        w = jax.random.uniform(kw, (fan_in, fan_out), jnp.float32, -bound, bound)
        b = jax.random.uniform(kb, (fan_out,), jnp.float32, -bound, bound)
        params[name] = (w, b)
    return params


def reference_forward(x, params):
    """Pure-JAX f32 reference for correctness check."""
    h = x
    for name in ["lin1", "lin2", "lin3"]:
        w, b = params[name]
        h = jnp.maximum(h @ w + b, 0.0)
    w, b = params["lin4"]
    return h @ w + b


if __name__ == "__main__":
    key = jax.random.PRNGKey(0)
    key, kx = jax.random.split(key)

    B = 8  # small batch for the smoke test
    x = jax.random.normal(kx, (B, _IN_FEATURES), jnp.float32)

    params = init_params(key)
    prep = prepare_params(params)

    out = regression_model_forward(x, prep)
    out = jax.block_until_ready(out)

    ref = reference_forward(x, params)
    assert out.shape == (B, _OUT_FEATURES), out.shape
    # bf16 matmuls (and possibly bf16 elementwise) vs f32 reference -> loose tol.
    max_err = jnp.max(jnp.abs(out - ref))
    assert jnp.allclose(out, ref, atol=5e-2, rtol=5e-2), f"max abs err {max_err}"

    print("KERNEL_OK")
</pallas_src>

<mosaic_0001>
module attributes {stable_mosaic.version = 11 : i64} {
  func.func @kernel(%arg0: i32, %arg1: memref<8x11xf32, #tpu.memory_space<vmem>>, %arg2: memref<16x256xbf16, #tpu.memory_space<vmem>>, %arg3: memref<1x256xf32, #tpu.memory_space<vmem>>, %arg4: memref<256x256xbf16, #tpu.memory_space<vmem>>, %arg5: memref<1x256xf32, #tpu.memory_space<vmem>>, %arg6: memref<256x256xbf16, #tpu.memory_space<vmem>>, %arg7: memref<1x256xf32, #tpu.memory_space<vmem>>, %arg8: memref<256x128xbf16, #tpu.memory_space<vmem>>, %arg9: memref<1x2xf32, #tpu.memory_space<vmem>>, %arg10: memref<8x2xf32, #tpu.memory_space<vmem>>, %arg11: memref<8x16xbf16, #tpu.memory_space<vmem>>) attributes {dimension_semantics = [#tpu.dimension_semantics<parallel>], iteration_bounds = array<i64: 1>, scalar_prefetch = 0 : i64, scratch_operands = 1 : i64, tpu.core_type = #tpu.core_type<tc>, window_params = [{transform_indices = @transform_0, window_bounds = array<i64: 8, 11>}, {pipeline_mode = #tpu.pipeline_mode<synchronous>, transform_indices = @transform_1, window_bounds = array<i64: 16, 256>}, {pipeline_mode = #tpu.pipeline_mode<synchronous>, transform_indices = @transform_2, window_bounds = array<i64: 1, 256>}, {pipeline_mode = #tpu.pipeline_mode<synchronous>, transform_indices = @transform_3, window_bounds = array<i64: 256, 256>}, {pipeline_mode = #tpu.pipeline_mode<synchronous>, transform_indices = @transform_4, window_bounds = array<i64: 1, 256>}, {pipeline_mode = #tpu.pipeline_mode<synchronous>, transform_indices = @transform_5, window_bounds = array<i64: 256, 256>}, {pipeline_mode = #tpu.pipeline_mode<synchronous>, transform_indices = @transform_6, window_bounds = array<i64: 1, 256>}, {pipeline_mode = #tpu.pipeline_mode<synchronous>, transform_indices = @transform_7, window_bounds = array<i64: 256, 128>}, {pipeline_mode = #tpu.pipeline_mode<synchronous>, transform_indices = @transform_8, window_bounds = array<i64: 1, 2>}, {transform_indices = @transform_9, window_bounds = array<i64: 8, 2>}]} {
    %cst = arith.constant 0.000000e+00 : bf16
    %0 = vector.broadcast %cst : bf16 to vector<8x5xbf16>
    %c0 = arith.constant 0 : index
    %c11 = arith.constant 11 : index
    %1 = vector.load %arg11[%c0, %c11] : memref<8x16xbf16, #tpu.memory_space<vmem>>, vector<8x5xbf16>
    tpu.vector_store %arg11[%c0, %c11], %0 {strides = array<i32>} : memref<8x16xbf16, #tpu.memory_space<vmem>>, vector<8x5xbf16>,
    %c0_0 = arith.constant 0 : index
    %c0_1 = arith.constant 0 : index
    %2 = vector.load %arg1[%c0_0, %c0_1] : memref<8x11xf32, #tpu.memory_space<vmem>>, vector<8x11xf32>
    %3 = arith.truncf %2 : vector<8x11xf32> to vector<8x11xbf16>
    %c0_2 = arith.constant 0 : index
    %c0_3 = arith.constant 0 : index
    %4 = vector.load %arg11[%c0_2, %c0_3] : memref<8x16xbf16, #tpu.memory_space<vmem>>, vector<8x11xbf16>
    tpu.vector_store %arg11[%c0_2, %c0_3], %3 {strides = array<i32>} : memref<8x16xbf16, #tpu.memory_space<vmem>>, vector<8x11xbf16>,
    %c0_4 = arith.constant 0 : index
    %c0_5 = arith.constant 0 : index
    %5 = vector.load %arg11[%c0_4, %c0_5] : memref<8x16xbf16, #tpu.memory_space<vmem>>, vector<8x16xbf16>
    %c0_6 = arith.constant 0 : index
    %c0_7 = arith.constant 0 : index
    %6 = vector.load %arg2[%c0_6, %c0_7] : memref<16x256xbf16, #tpu.memory_space<vmem>>, vector<16x256xbf16>
    %cst_8 = arith.constant dense<0.000000e+00> : vector<8x256xf32>
    %7 = tpu.matmul %5, %6, %cst_8 {dimension_numbers = #tpu.dot_dimension_numbers<[1], [0], [0], [1], [0, 0, 1, 1], [], []>} : vector<8x16xbf16>, vector<16x256xbf16>, vector<8x256xf32> -> vector<8x256xf32>
    %c0_9 = arith.constant 0 : index
    %c0_10 = arith.constant 0 : index
    %8 = vector.load %arg3[%c0_9, %c0_10] : memref<1x256xf32, #tpu.memory_space<vmem>>, vector<1x256xf32>
    %9 = vector.broadcast %8 : vector<1x256xf32> to vector<8x256xf32>
    %10 = arith.addf %7, %9 : vector<8x256xf32>
    %cst_11 = arith.constant 0.000000e+00 : f32
    %11 = vector.broadcast %cst_11 : f32 to vector<8x256xf32>
    %12 = arith.maximumf %10, %11 : vector<8x256xf32>
    %13 = arith.truncf %12 : vector<8x256xf32> to vector<8x256xbf16>
    %c0_12 = arith.constant 0 : index
    %c0_13 = arith.constant 0 : index
    %14 = vector.load %arg4[%c0_12, %c0_13] : memref<256x256xbf16, #tpu.memory_space<vmem>>, vector<256x256xbf16>
    %cst_14 = arith.constant dense<0.000000e+00> : vector<8x256xf32>
    %15 = tpu.matmul %13, %14, %cst_14 {dimension_numbers = #tpu.dot_dimension_numbers<[1], [0], [0], [1], [0, 0, 1, 1], [], []>} : vector<8x256xbf16>, vector<256x256xbf16>, vector<8x256xf32> -> vector<8x256xf32>
    %c0_15 = arith.constant 0 : index
    %c0_16 = arith.constant 0 : index
    %16 = vector.load %arg5[%c0_15, %c0_16] : memref<1x256xf32, #tpu.memory_space<vmem>>, vector<1x256xf32>
    %17 = vector.broadcast %16 : vector<1x256xf32> to vector<8x256xf32>
    %18 = arith.addf %15, %17 : vector<8x256xf32>
    %cst_17 = arith.constant 0.000000e+00 : f32
    %19 = vector.broadcast %cst_17 : f32 to vector<8x256xf32>
    %20 = arith.maximumf %18, %19 : vector<8x256xf32>
    %21 = arith.truncf %20 : vector<8x256xf32> to vector<8x256xbf16>
    %c0_18 = arith.constant 0 : index
    %c0_19 = arith.constant 0 : index
    %22 = vector.load %arg6[%c0_18, %c0_19] : memref<256x256xbf16, #tpu.memory_space<vmem>>, vector<256x256xbf16>
    %cst_20 = arith.constant dense<0.000000e+00> : vector<8x256xf32>
    %23 = tpu.matmul %21, %22, %cst_20 {dimension_numbers = #tpu.dot_dimension_numbers<[1], [0], [0], [1], [0, 0, 1, 1], [], []>} : vector<8x256xbf16>, vector<256x256xbf16>, vector<8x256xf32> -> vector<8x256xf32>
    %c0_21 = arith.constant 0 : index
    %c0_22 = arith.constant 0 : index
    %24 = vector.load %arg7[%c0_21, %c0_22] : memref<1x256xf32, #tpu.memory_space<vmem>>, vector<1x256xf32>
    %25 = vector.broadcast %24 : vector<1x256xf32> to vector<8x256xf32>
    %26 = arith.addf %23, %25 : vector<8x256xf32>
    %cst_23 = arith.constant 0.000000e+00 : f32
    %27 = vector.broadcast %cst_23 : f32 to vector<8x256xf32>
    %28 = arith.maximumf %26, %27 : vector<8x256xf32>
    %29 = arith.truncf %28 : vector<8x256xf32> to vector<8x256xbf16>
    %c0_24 = arith.constant 0 : index
    %c0_25 = arith.constant 0 : index
    %30 = vector.load %arg8[%c0_24, %c0_25] : memref<256x128xbf16, #tpu.memory_space<vmem>>, vector<256x128xbf16>
    %cst_26 = arith.constant dense<0.000000e+00> : vector<8x128xf32>
    %31 = tpu.matmul %29, %30, %cst_26 {dimension_numbers = #tpu.dot_dimension_numbers<[1], [0], [0], [1], [0, 0, 1, 1], [], []>} : vector<8x256xbf16>, vector<256x128xbf16>, vector<8x128xf32> -> vector<8x128xf32>
    %32 = vector.extract_strided_slice %31 {offsets = [0, 0], sizes = [8, 2], strides = [1, 1]} : vector<8x128xf32> to vector<8x2xf32>
    %c0_27 = arith.constant 0 : index
    %c0_28 = arith.constant 0 : index
    %33 = vector.load %arg9[%c0_27, %c0_28] : memref<1x2xf32, #tpu.memory_space<vmem>>, vector<1x2xf32>
    %34 = vector.broadcast %33 : vector<1x2xf32> to vector<8x2xf32>
    %35 = arith.addf %32, %34 : vector<8x2xf32>
    %c0_29 = arith.constant 0 : index
    %c0_30 = arith.constant 0 : index
    %36 = vector.load %arg10[%c0_29, %c0_30] : memref<8x2xf32, #tpu.memory_space<vmem>>, vector<8x2xf32>
    tpu.vector_store %arg10[%c0_29, %c0_30], %35 {strides = array<i32>} : memref<8x2xf32, #tpu.memory_space<vmem>>, vector<8x2xf32>,
    return
  }
  func.func @transform_0(%arg0: i32) -> (i32, i32) {
    %c0_i32 = arith.constant 0 : i32
    %c0_i32_0 = arith.constant 0 : i32
    return %arg0, %c0_i32 : i32, i32
  }
  func.func @transform_1(%arg0: i32) -> (i32, i32) {
    %c0_i32 = arith.constant 0 : i32
    %c0_i32_0 = arith.constant 0 : i32
    %c0_i32_1 = arith.constant 0 : i32
    return %c0_i32, %c0_i32_0 : i32, i32
  }
  func.func @transform_2(%arg0: i32) -> (i32, i32) {
    %c0_i32 = arith.constant 0 : i32
    %c0_i32_0 = arith.constant 0 : i32
    %c0_i32_1 = arith.constant 0 : i32
    return %c0_i32, %c0_i32_0 : i32, i32
  }
  func.func @transform_3(%arg0: i32) -> (i32, i32) {
    %c0_i32 = arith.constant 0 : i32
    %c0_i32_0 = arith.constant 0 : i32
    %c0_i32_1 = arith.constant 0 : i32
    return %c0_i32, %c0_i32_0 : i32, i32
  }
  func.func @transform_4(%arg0: i32) -> (i32, i32) {
    %c0_i32 = arith.constant 0 : i32
    %c0_i32_0 = arith.constant 0 : i32
    %c0_i32_1 = arith.constant 0 : i32
    return %c0_i32, %c0_i32_0 : i32, i32
  }
  func.func @transform_5(%arg0: i32) -> (i32, i32) {
    %c0_i32 = arith.constant 0 : i32
    %c0_i32_0 = arith.constant 0 : i32
    %c0_i32_1 = arith.constant 0 : i32
    return %c0_i32, %c0_i32_0 : i32, i32
  }
  func.func @transform_6(%arg0: i32) -> (i32, i32) {
    %c0_i32 = arith.constant 0 : i32
    %c0_i32_0 = arith.constant 0 : i32
    %c0_i32_1 = arith.constant 0 : i32
    return %c0_i32, %c0_i32_0 : i32, i32
  }
  func.func @transform_7(%arg0: i32) -> (i32, i32) {
    %c0_i32 = arith.constant 0 : i32
    %c0_i32_0 = arith.constant 0 : i32
    %c0_i32_1 = arith.constant 0 : i32
    return %c0_i32, %c0_i32_0 : i32, i32
  }
  func.func @transform_8(%arg0: i32) -> (i32, i32) {
    %c0_i32 = arith.constant 0 : i32
    %c0_i32_0 = arith.constant 0 : i32
    %c0_i32_1 = arith.constant 0 : i32
    return %c0_i32, %c0_i32_0 : i32, i32
  }
  func.func @transform_9(%arg0: i32) -> (i32, i32) {
    %c0_i32 = arith.constant 0 : i32
    %c0_i32_0 = arith.constant 0 : i32
    return %arg0, %c0_i32 : i32, i32
  }
}

</mosaic_0001>

<llo_original>
// kernel: regression_model_forward.1
$region0: #{regression_model_forward.1}
  #allocation0 [shape = 'u32[]', space=smem, size = 0x4, offset = 0x4, fixed_abs, tag = 'smem constant byte address 0x4 - core index']
  #allocation1 [shape = 'u32[144,128]{1,0:T(1,128)}', space=vmem, size = 0x12000, scoped, tag = 'internal scratch']
  #allocation2 [shape = 'bf16[8,16]{1,0:T(8,128)(2,1)}', space=vmem, size = 0x800, scoped, tag = 'scratch operand']
  %s0 = inlined_call_operand.hbm [shape: f32[8,11], index: 0, kind: input, shape index: {}]
  %s1 = inlined_call_operand.vmem [shape: bf16[16,256], index: 1, kind: input, shape index: {}]
  %s2 = inlined_call_operand.vmem [shape: f32[1,256], index: 2, kind: input, shape index: {}]
  %s3 = inlined_call_operand.hbm [shape: bf16[256,256], index: 3, kind: input, shape index: {}]
  %s4 = inlined_call_operand.hbm [shape: f32[1,256], index: 4, kind: input, shape index: {}]
  %s5 = inlined_call_operand.hbm [shape: bf16[256,256], index: 5, kind: input, shape index: {}]
  %s6 = inlined_call_operand.hbm [shape: f32[1,256], index: 6, kind: input, shape index: {}]
  %s7 = inlined_call_operand.hbm [shape: bf16[256,128], index: 7, kind: input, shape index: {}]
  %s8 = inlined_call_operand.hbm [shape: f32[1,2], index: 8, kind: input, shape index: {}]
  %s9 = inlined_call_operand.vmem [shape: f32[8,2], index: 9, kind: output, shape index: {}]
  %s10 = sld [smem:[#allocation0]]
  $region74: #{regression_model_forward.1} parent=0
    _
  %s12 = ssub.s32 1, %s10
  %s13 = scalar_select 0, %s12, %s10
  $region1: #{regression_model_forward.1} parent=0
    #allocation3 [shape = 'u8[4096]{0}', space=vmem, size = 0x1000, scoped, tag = 'input window, operand 0, single buffered']
    #allocation4 [shape = 's32[1]{0}', space=sflag, size = 0x4, scoped, tag = 'scoped memory for regression_model_forward.1']
    #allocation5 [shape = 'u8[131072]{0}', space=vmem, size = 0x20000, scoped, tag = 'input window, operand 3, single buffered']
    #allocation6 [shape = 's32[1]{0}', space=sflag, size = 0x4, scoped, tag = 'scoped memory for regression_model_forward.1']
    #allocation7 [shape = 'u8[1024]{0}', space=vmem, size = 0x400, scoped, tag = 'input window, operand 4, single buffered']
    #allocation8 [shape = 'u8[131072]{0}', space=vmem, size = 0x20000, scoped, tag = 'input window, operand 5, single buffered']
    #allocation9 [shape = 's32[1]{0}', space=sflag, size = 0x4, scoped, tag = 'scoped memory for regression_model_forward.1']
    #allocation10 [shape = 'u8[1024]{0}', space=vmem, size = 0x400, scoped, tag = 'input window, operand 6, single buffered']
    #allocation11 [shape = 'u8[65536]{0}', space=vmem, size = 0x10000, scoped, tag = 'input window, operand 7, single buffered']
    #allocation12 [shape = 's32[1]{0}', space=sflag, size = 0x4, scoped, tag = 'scoped memory for regression_model_forward.1']
    #allocation13 [shape = 'u8[512]{0}', space=vmem, size = 0x400, scoped, tag = 'input window, operand 8, single buffered']
    %14 = vsyncpa [#allocation4], 0
    %15 = vsyncpa [#allocation6], 0
    %16 = vsyncpa [#allocation9], 0
    %17 = vsyncpa [#allocation12], 0
    // Predicated region
    $region2: #{regression_model_forward.1} parent=1 // pred_check
      _
    $region3: #{regression_model_forward.1} parent=1 // pred_check_branch
      %19 = sbr.rel (0) target = $region5
    $region4: #{regression_model_forward.1} parent=1 // pred_region
      %s21 = ssub.s32 128, 128
      %22 = vsyncadd [#allocation4], %s21
      %s24 = sshll.u32 [#allocation3], 4
      %s25 = int_to_ptr.vmem [resolvable:$true] %s24
      %27 = dma.hbm_to_vmem [thread:$0]  %s0, 128, %s25, [#allocation4]
    $region5: #{regression_model_forward.1} parent=1 // pred_fallthru
      _
    // Predicated region
    $region6: #{regression_model_forward.1} parent=1 // pred_check
      _
    $region7: #{regression_model_forward.1} parent=1 // pred_check_branch
      %29 = sbr.rel (0) target = $region9
    $region8: #{regression_model_forward.1} parent=1 // pred_region
      _
    $region9: #{regression_model_forward.1} parent=1 // pred_fallthru
      _
    // Predicated region
    $region10: #{regression_model_forward.1} parent=1 // pred_check
      _
    $region11: #{regression_model_forward.1} parent=1 // pred_check_branch
      %31 = sbr.rel (0) target = $region13
    $region12: #{regression_model_forward.1} parent=1 // pred_region
      _
    $region13: #{regression_model_forward.1} parent=1 // pred_fallthru
      _
    // Predicated region
    $region14: #{regression_model_forward.1} parent=1 // pred_check
      _
    $region15: #{regression_model_forward.1} parent=1 // pred_check_branch
      %33 = sbr.rel (0) target = $region17
    $region16: #{regression_model_forward.1} parent=1 // pred_region
      %s35 = ssub.s32 4096, 4096
      %36 = vsyncadd [#allocation6], %s35
      %s37 = sshll.u32 [#allocation5], 4
      %s38 = int_to_ptr.vmem [resolvable:$true] %s37
      %43 = dma.hbm_to_vmem [thread:$0]  %s3, 4096, %s38, [#allocation6], 128, 128, 8
    $region17: #{regression_model_forward.1} parent=1 // pred_fallthru
      _
    // Predicated region
    $region18: #{regression_model_forward.1} parent=1 // pred_check
      _
    $region19: #{regression_model_forward.1} parent=1 // pred_check_branch
      %45 = sbr.rel (0) target = $region21
    $region20: #{regression_model_forward.1} parent=1 // pred_region
      %s47 = ssub.s32 32, 32
      %48 = vsyncadd [#allocation6], %s47
      %s50 = sshll.u32 [#allocation7], 4
      %s51 = int_to_ptr.vmem [resolvable:$true] %s50
      %53 = dma.hbm_to_vmem [thread:$0]  %s4, 32, %s51, [#allocation6]
    $region21: #{regression_model_forward.1} parent=1 // pred_fallthru
      _
    // Predicated region
    $region22: #{regression_model_forward.1} parent=1 // pred_check
      _
    $region23: #{regression_model_forward.1} parent=1 // pred_check_branch
      %55 = sbr.rel (0) target = $region25
    $region24: #{regression_model_forward.1} parent=1 // pred_region
      %s57 = ssub.s32 4096, 4096
      %58 = vsyncadd [#allocation9], %s57
      %s59 = sshll.u32 [#allocation8], 4
      %s60 = int_to_ptr.vmem [resolvable:$true] %s59
      %65 = dma.hbm_to_vmem [thread:$0]  %s5, 4096, %s60, [#allocation9], 128, 128, 8
    $region25: #{regression_model_forward.1} parent=1 // pred_fallthru
      _
    // Predicated region
    $region26: #{regression_model_forward.1} parent=1 // pred_check
      _
    $region27: #{regression_model_forward.1} parent=1 // pred_check_branch
      %67 = sbr.rel (0) target = $region29
    $region28: #{regression_model_forward.1} parent=1 // pred_region
      %s69 = ssub.s32 32, 32
      %70 = vsyncadd [#allocation9], %s69
      %s72 = sshll.u32 [#allocation10], 4
      %s73 = int_to_ptr.vmem [resolvable:$true] %s72
      %75 = dma.hbm_to_vmem [thread:$0]  %s6, 32, %s73, [#allocation9]
    $region29: #{regression_model_forward.1} parent=1 // pred_fallthru
      _
    // Predicated region
    $region30: #{regression_model_forward.1} parent=1 // pred_check
      _
    $region31: #{regression_model_forward.1} parent=1 // pred_check_branch
      %77 = sbr.rel (0) target = $region33
    $region32: #{regression_model_forward.1} parent=1 // pred_region
      %s79 = ssub.s32 2048, 2048
      %80 = vsyncadd [#allocation12], %s79
      %s81 = sshll.u32 [#allocation11], 4
      %s82 = int_to_ptr.vmem [resolvable:$true] %s81
      %87 = dma.hbm_to_vmem [thread:$0]  %s7, 2048, %s82, [#allocation12], 64, 64, 4
    $region33: #{regression_model_forward.1} parent=1 // pred_fallthru
      _
    // Predicated region
    $region34: #{regression_model_forward.1} parent=1 // pred_check
      _
    $region35: #{regression_model_forward.1} parent=1 // pred_check_branch
      %89 = sbr.rel (0) target = $region37
    $region36: #{regression_model_forward.1} parent=1 // pred_region
      %s91 = ssub.s32 16, 16
      %92 = vsyncadd [#allocation12], %s91
      %s94 = sshll.u32 [#allocation13], 4
      %s95 = int_to_ptr.vmem [resolvable:$true] %s94
      %97 = dma.hbm_to_vmem [thread:$0]  %s8, 16, %s95, [#allocation12]
    $region37: #{regression_model_forward.1} parent=1 // pred_fallthru
      _
    // Predicated region
    $region38: #{regression_model_forward.1} parent=1 // pred_check
      _
    $region39: #{regression_model_forward.1} parent=1 // pred_check_branch
      %99 = sbr.rel (0) target = $region41
    $region40: #{regression_model_forward.1} parent=1 // pred_region
      %100 = dma.done [#allocation4], 128
    $region41: #{regression_model_forward.1} parent=1 // pred_fallthru
      _
    // Predicated region
    $region42: #{regression_model_forward.1} parent=1 // pred_check
      _
    $region43: #{regression_model_forward.1} parent=1 // pred_check_branch
      %102 = sbr.rel (0) target = $region45
    $region44: #{regression_model_forward.1} parent=1 // pred_region
      %103 = dma.done [#allocation6], 4096
    $region45: #{regression_model_forward.1} parent=1 // pred_fallthru
      _
    // Predicated region
    $region46: #{regression_model_forward.1} parent=1 // pred_check
      _
    $region47: #{regression_model_forward.1} parent=1 // pred_check_branch
      %105 = sbr.rel (0) target = $region49
    $region48: #{regression_model_forward.1} parent=1 // pred_region
      %106 = dma.done [#allocation6], 32
    $region49: #{regression_model_forward.1} parent=1 // pred_fallthru
      _
    // Predicated region
    $region50: #{regression_model_forward.1} parent=1 // pred_check
      _
    $region51: #{regression_model_forward.1} parent=1 // pred_check_branch
      %108 = sbr.rel (0) target = $region53
    $region52: #{regression_model_forward.1} parent=1 // pred_region
      %109 = dma.done [#allocation9], 4096
    $region53: #{regression_model_forward.1} parent=1 // pred_fallthru
      _
    // Predicated region
    $region54: #{regression_model_forward.1} parent=1 // pred_check
      _
    $region55: #{regression_model_forward.1} parent=1 // pred_check_branch
      %111 = sbr.rel (0) target = $region57
    $region56: #{regression_model_forward.1} parent=1 // pred_region
      %112 = dma.done [#allocation9], 32
    $region57: #{regression_model_forward.1} parent=1 // pred_fallthru
      _
    // Predicated region
    $region58: #{regression_model_forward.1} parent=1 // pred_check
      _
    $region59: #{regression_model_forward.1} parent=1 // pred_check_branch
      %114 = sbr.rel (0) target = $region61
    $region60: #{regression_model_forward.1} parent=1 // pred_region
      %115 = dma.done [#allocation12], 2048
    $region61: #{regression_model_forward.1} parent=1 // pred_fallthru
      _
    // Predicated region
    $region62: #{regression_model_forward.1} parent=1 // pred_check
      _
    $region63: #{regression_model_forward.1} parent=1 // pred_check_branch
      %117 = sbr.rel (0) target = $region65
    $region64: #{regression_model_forward.1} parent=1 // pred_region
      %118 = dma.done [#allocation12], 16
    $region65: #{regression_model_forward.1} parent=1 // pred_fallthru
      _
    %vm120 = vcmask 126040
    %121 = vst.msk [vmem:[#allocation2] sm:$0xf] %vm120, 0
    %v122 = vld [vmem:[#allocation3] sm:$0xff]
    %v123 = vpack.c.bf16 %v122, %v122
    %vm124 = vcmask 84992
    %125 = vst.msk [vmem:[#allocation2] sm:$0xf] %vm124, %v123
    %v126 = vld [vmem:[#allocation2] sm:$0xf]
    %v127 = vld [vmem:[%s1] sm:$0xff]
    %v128 = vld [vmem:[%s1 + $0x8] sm:$0xff]
    %v129 = vld [vmem:[%s2] sm:$0x3]
    %v131 = vlaneseq
    %v132 = vshrl.u32 %v131, 7
    %v133 = vsub.s32 0, %v132
    %v134 = vrot.slane %v129, %v133
    %v135 = vlaneseq
    %v136 = vshrl.u32 %v135, 7
    %v137 = vsub.s32 1, %v136
    %v138 = vrot.slane %v129, %v137
    %v143 = vunpack.c.l.b16 %v127
    %v144 = vunpack.c.h.b16 %v127
    %v145 = vunpack.c.l.b16 %v128
    %v146 = vunpack.c.h.b16 %v128
    %v147 = vpack.c.b16 %v145, %v143
    %v148 = vpack.c.b16 %v146, %v144
    %vm151 = vcmask 130048
    %v153 = vsel %vm151, %v126, 0
    %155 = vmatprep.subr.bf16.mxu0 %v148
    %156 = vmatpush1.bf16.msra.mxu0 %v147
    %157 = vmatprep.subr.bf16.mxu0 0
    %158 = vmatpush1.bf16.msra.mxu0 0
    %159 = vmatprep.subr.bf16.mxu0 0
    %160 = vmatpush1.bf16.msra.mxu0 0
    %161 = vmatprep.subr.bf16.mxu0 0
    %162 = vmatpush1.bf16.msra.mxu0 0
    %163 = vmatprep.subr.bf16.mxu0 0
    %164 = vmatpush1.bf16.msra.mxu0 0
    %165 = vmatprep.subr.bf16.mxu0 0
    %166 = vmatpush1.bf16.msra.mxu0 0
    %167 = vmatprep.subr.bf16.mxu0 0
    %168 = vmatpush1.bf16.msra.mxu0 0
    %169 = vmatprep.subr.bf16.mxu0 0
    %170 = vmatpush1.bf16.msra.mxu0 0
    %171 = vmatprep.subr.bf16.mxu0 0
    %172 = vmatpush1.bf16.msra.mxu0 0
    %173 = vmatprep.subr.bf16.mxu0 0
    %174 = vmatpush1.bf16.msra.mxu0 0
    %175 = vmatprep.subr.bf16.mxu0 0
    %176 = vmatpush1.bf16.msra.mxu0 0
    %177 = vmatprep.subr.bf16.mxu0 0
    %178 = vmatpush1.bf16.msra.mxu0 0
    %179 = vmatprep.subr.bf16.mxu0 0
    %180 = vmatpush1.bf16.msra.mxu0 0
    %181 = vmatprep.subr.bf16.mxu0 0
    %182 = vmatpush1.bf16.msra.mxu0 0
    %183 = vmatprep.subr.bf16.mxu0 0
    %184 = vmatpush1.bf16.msra.mxu0 0
    %185 = vmatprep.subr.bf16.mxu0 0
    %186 = vmatpush1.bf16.msra.mxu0 0
    %187 = vmatprep.mubr.bf16.mxu0 0
    %188 = vmatmul.mubr.bf16.gmra.mrb[0].mxu0 %v153
    %v189 = vpop.f32.mrb[0].mxu0
    %v190 = vadd.f32 %v134, %v189
    %v191 = vpop.f32.mrb[0].mxu0
    %v192 = vadd.f32 %v138, %v191
    %v193 = vpop.f32.mrb[0].mxu0
    %v194 = vpop.f32.mrb[0].mxu0
    %195 = vdwg.mxu0
    %v196 = vmax.f32 %v190, 0.0
    %v197 = vmax.f32 %v192, 0.0
    %v198 = vpack.c.bf16 %v196, %v196
    %v199 = vpack.c.bf16 %v197, %v197
    %v200 = vld [vmem:[#allocation5] sm:$0xff]
    %v201 = vld [vmem:[#allocation5 + $0x8] sm:$0xff]
    %v202 = vld [vmem:[#allocation5 + $0x10] sm:$0xff]
    %v203 = vld [vmem:[#allocation5 + $0x18] sm:$0xff]
    %v204 = vld [vmem:[#allocation5 + $0x20] sm:$0xff]
    %v205 = vld [vmem:[#allocation5 + $0x28] sm:$0xff]
    %v206 = vld [vmem:[#allocation5 + $0x30] sm:$0xff]
    %v207 = vld [vmem:[#allocation5 + $0x38] sm:$0xff]
    %v208 = vld [vmem:[#allocation5 + $0x40] sm:$0xff]
    %v209 = vld [vmem:[#allocation5 + $0x48] sm:$0xff]
    %v210 = vld [vmem:[#allocation5 + $0x50] sm:$0xff]
    %v211 = vld [vmem:[#allocation5 + $0x58] sm:$0xff]
    %v212 = vld [vmem:[#allocation5 + $0x60] sm:$0xff]
    %v213 = vld [vmem:[#allocation5 + $0x68] sm:$0xff]
    %v214 = vld [vmem:[#allocation5 + $0x70] sm:$0xff]
    %v215 = vld [vmem:[#allocation5 + $0x78] sm:$0xff]
    %v216 = vld [vmem:[#allocation5 + $0x80] sm:$0xff]
    %v217 = vld [vmem:[#allocation5 + $0x88] sm:$0xff]
    %v218 = vld [vmem:[#allocation5 + $0x90] sm:$0xff]
    %v219 = vld [vmem:[#allocation5 + $0x98] sm:$0xff]
    %v220 = vld [vmem:[#allocation5 + $0xa0] sm:$0xff]
    %v221 = vld [vmem:[#allocation5 + $0xa8] sm:$0xff]
    %v222 = vld [vmem:[#allocation5 + $0xb0] sm:$0xff]
    %v223 = vld [vmem:[#allocation5 + $0xb8] sm:$0xff]
    %v224 = vld [vmem:[#allocation5 + $0xc0] sm:$0xff]
    %v225 = vld [vmem:[#allocation5 + $0xc8] sm:$0xff]
    %v226 = vld [vmem:[#allocation5 + $0xd0] sm:$0xff]
    %v227 = vld [vmem:[#allocation5 + $0xd8] sm:$0xff]
    %v228 = vld [vmem:[#allocation5 + $0xe0] sm:$0xff]
    %v229 = vld [vmem:[#allocation5 + $0xe8] sm:$0xff]
    %v230 = vld [vmem:[#allocation5 + $0xf0] sm:$0xff]
    %v231 = vld [vmem:[#allocation5 + $0xf8] sm:$0xff]
    %v232 = vld [vmem:[#allocation7] sm:$0x3]
    %v234 = vlaneseq
    %v235 = vshrl.u32 %v234, 7
    %v236 = vsub.s32 0, %v235
    %v237 = vrot.slane %v232, %v236
    %v238 = vlaneseq
    %v239 = vshrl.u32 %v238, 7
    %v240 = vsub.s32 1, %v239
    %v241 = vrot.slane %v232, %v240
    %v276 = vunpack.c.l.b16 %v200
    %v277 = vunpack.c.h.b16 %v200
    %v278 = vunpack.c.l.b16 %v201
    %v279 = vunpack.c.h.b16 %v201
    %v280 = vunpack.c.l.b16 %v202
    %v281 = vunpack.c.h.b16 %v202
    %v282 = vunpack.c.l.b16 %v203
    %v283 = vunpack.c.h.b16 %v203
    %v284 = vunpack.c.l.b16 %v204
    %v285 = vunpack.c.h.b16 %v204
    %v286 = vunpack.c.l.b16 %v205
    %v287 = vunpack.c.h.b16 %v205
    %v288 = vunpack.c.l.b16 %v206
    %v289 = vunpack.c.h.b16 %v206
    %v290 = vunpack.c.l.b16 %v207
    %v291 = vunpack.c.h.b16 %v207
    %v292 = vunpack.c.l.b16 %v208
    %v293 = vunpack.c.h.b16 %v208
    %v294 = vunpack.c.l.b16 %v209
    %v295 = vunpack.c.h.b16 %v209
    %v296 = vunpack.c.l.b16 %v210
    %v297 = vunpack.c.h.b16 %v210
    %v298 = vunpack.c.l.b16 %v211
    %v299 = vunpack.c.h.b16 %v211
    %v300 = vunpack.c.l.b16 %v212
    %v301 = vunpack.c.h.b16 %v212
    %v302 = vunpack.c.l.b16 %v213
    %v303 = vunpack.c.h.b16 %v213
    %v304 = vunpack.c.l.b16 %v214
    %v305 = vunpack.c.h.b16 %v214
    %v306 = vunpack.c.l.b16 %v215
    %v307 = vunpack.c.h.b16 %v215
    %v308 = vunpack.c.l.b16 %v216
    %v309 = vunpack.c.h.b16 %v216
    %v310 = vunpack.c.l.b16 %v217
    %v311 = vunpack.c.h.b16 %v217
    %v312 = vunpack.c.l.b16 %v218
    %v313 = vunpack.c.h.b16 %v218
    %v314 = vunpack.c.l.b16 %v219
    %v315 = vunpack.c.h.b16 %v219
    %v316 = vunpack.c.l.b16 %v220
    %v317 = vunpack.c.h.b16 %v220
    %v318 = vunpack.c.l.b16 %v221
    %v319 = vunpack.c.h.b16 %v221
    %v320 = vunpack.c.l.b16 %v222
    %v321 = vunpack.c.h.b16 %v222
    %v322 = vunpack.c.l.b16 %v223
    %v323 = vunpack.c.h.b16 %v223
    %v324 = vunpack.c.l.b16 %v224
    %v325 = vunpack.c.h.b16 %v224
    %v326 = vunpack.c.l.b16 %v225
    %v327 = vunpack.c.h.b16 %v225
    %v328 = vunpack.c.l.b16 %v226
    %v329 = vunpack.c.h.b16 %v226
    %v330 = vunpack.c.l.b16 %v227
    %v331 = vunpack.c.h.b16 %v227
    %v332 = vunpack.c.l.b16 %v228
    %v333 = vunpack.c.h.b16 %v228
    %v334 = vunpack.c.l.b16 %v229
    %v335 = vunpack.c.h.b16 %v229
    %v336 = vunpack.c.l.b16 %v230
    %v337 = vunpack.c.h.b16 %v230
    %v338 = vunpack.c.l.b16 %v231
    %v339 = vunpack.c.h.b16 %v231
    %v340 = vpack.c.b16 %v278, %v276
    %v341 = vpack.c.b16 %v279, %v277
    %v342 = vpack.c.b16 %v282, %v280
    %v343 = vpack.c.b16 %v283, %v281
    %v344 = vpack.c.b16 %v286, %v284
    %v345 = vpack.c.b16 %v287, %v285
    %v346 = vpack.c.b16 %v290, %v288
    %v347 = vpack.c.b16 %v291, %v289
    %v348 = vpack.c.b16 %v294, %v292
    %v349 = vpack.c.b16 %v295, %v293
    %v350 = vpack.c.b16 %v298, %v296
    %v351 = vpack.c.b16 %v299, %v297
    %v352 = vpack.c.b16 %v302, %v300
    %v353 = vpack.c.b16 %v303, %v301
    %v354 = vpack.c.b16 %v306, %v304
    %v355 = vpack.c.b16 %v307, %v305
    %v356 = vpack.c.b16 %v310, %v308
    %v357 = vpack.c.b16 %v311, %v309
    %v358 = vpack.c.b16 %v314, %v312
    %v359 = vpack.c.b16 %v315, %v313
    %v360 = vpack.c.b16 %v318, %v316
    %v361 = vpack.c.b16 %v319, %v317
    %v362 = vpack.c.b16 %v322, %v320
    %v363 = vpack.c.b16 %v323, %v321
    %v364 = vpack.c.b16 %v326, %v324
    %v365 = vpack.c.b16 %v327, %v325
    %v366 = vpack.c.b16 %v330, %v328
    %v367 = vpack.c.b16 %v331, %v329
    %v368 = vpack.c.b16 %v334, %v332
    %v369 = vpack.c.b16 %v335, %v333
    %v370 = vpack.c.b16 %v338, %v336
    %v371 = vpack.c.b16 %v339, %v337
    %404 = vmatprep.subr.bf16.mxu0 %v341
    %405 = vmatpush1.bf16.msra.mxu0 %v340
    %406 = vmatprep.subr.bf16.mxu0 %v343
    %407 = vmatpush1.bf16.msra.mxu0 %v342
    %408 = vmatprep.subr.bf16.mxu0 %v345
    %409 = vmatpush1.bf16.msra.mxu0 %v344
    %410 = vmatprep.subr.bf16.mxu0 %v347
    %411 = vmatpush1.bf16.msra.mxu0 %v346
    %412 = vmatprep.subr.bf16.mxu0 %v349
    %413 = vmatpush1.bf16.msra.mxu0 %v348
    %414 = vmatprep.subr.bf16.mxu0 %v351
    %415 = vmatpush1.bf16.msra.mxu0 %v350
    %416 = vmatprep.subr.bf16.mxu0 %v353
    %417 = vmatpush1.bf16.msra.mxu0 %v352
    %418 = vmatprep.subr.bf16.mxu0 %v355
    %419 = vmatpush1.bf16.msra.mxu0 %v354
    %420 = vmatprep.subr.bf16.mxu0 %v357
    %421 = vmatpush1.bf16.msra.mxu0 %v356
    %422 = vmatprep.subr.bf16.mxu0 %v359
    %423 = vmatpush1.bf16.msra.mxu0 %v358
    %424 = vmatprep.subr.bf16.mxu0 %v361
    %425 = vmatpush1.bf16.msra.mxu0 %v360
    %426 = vmatprep.subr.bf16.mxu0 %v363
    %427 = vmatpush1.bf16.msra.mxu0 %v362
    %428 = vmatprep.subr.bf16.mxu0 %v365
    %429 = vmatpush1.bf16.msra.mxu0 %v364
    %430 = vmatprep.subr.bf16.mxu0 %v367
    %431 = vmatpush1.bf16.msra.mxu0 %v366
    %432 = vmatprep.subr.bf16.mxu0 %v369
    %433 = vmatpush1.bf16.msra.mxu0 %v368
    %434 = vmatprep.subr.bf16.mxu0 %v371
    %435 = vmatpush1.bf16.msra.mxu0 %v370
    %436 = vmatprep.mubr.bf16.mxu0 %v199
    %437 = vmatmul.mubr.bf16.gmra.mrb[0].mxu0 %v198
    %v438 = vpop.f32.mrb[0].mxu0
    %v439 = vadd.f32 %v237, %v438
    %v440 = vpop.f32.mrb[0].mxu0
    %v441 = vadd.f32 %v241, %v440
    %v442 = vpop.f32.mrb[0].mxu0
    %v443 = vpop.f32.mrb[0].mxu0
    %444 = vdwg.mxu0
    %v445 = vmax.f32 %v439, 0.0
    %v446 = vmax.f32 %v441, 0.0
    %v447 = vpack.c.bf16 %v445, %v445
    %v448 = vpack.c.bf16 %v446, %v446
    %v449 = vld [vmem:[#allocation8] sm:$0xff]
    %v450 = vld [vmem:[#allocation8 + $0x8] sm:$0xff]
    %v451 = vld [vmem:[#allocation8 + $0x10] sm:$0xff]
    %v452 = vld [vmem:[#allocation8 + $0x18] sm:$0xff]
    %v453 = vld [vmem:[#allocation8 + $0x20] sm:$0xff]
    %v454 = vld [vmem:[#allocation8 + $0x28] sm:$0xff]
    %v455 = vld [vmem:[#allocation8 + $0x30] sm:$0xff]
    %v456 = vld [vmem:[#allocation8 + $0x38] sm:$0xff]
    %v457 = vld [vmem:[#allocation8 + $0x40] sm:$0xff]
    %v458 = vld [vmem:[#allocation8 + $0x48] sm:$0xff]
    %v459 = vld [vmem:[#allocation8 + $0x50] sm:$0xff]
    %v460 = vld [vmem:[#allocation8 + $0x58] sm:$0xff]
    %v461 = vld [vmem:[#allocation8 + $0x60] sm:$0xff]
    %v462 = vld [vmem:[#allocation8 + $0x68] sm:$0xff]
    %v463 = vld [vmem:[#allocation8 + $0x70] sm:$0xff]
    %v464 = vld [vmem:[#allocation8 + $0x78] sm:$0xff]
    %v465 = vld [vmem:[#allocation8 + $0x80] sm:$0xff]
    %v466 = vld [vmem:[#allocation8 + $0x88] sm:$0xff]
    %v467 = vld [vmem:[#allocation8 + $0x90] sm:$0xff]
    %v468 = vld [vmem:[#allocation8 + $0x98] sm:$0xff]
    %v469 = vld [vmem:[#allocation8 + $0xa0] sm:$0xff]
    %v470 = vld [vmem:[#allocation8 + $0xa8] sm:$0xff]
    %v471 = vld [vmem:[#allocation8 + $0xb0] sm:$0xff]
    %v472 = vld [vmem:[#allocation8 + $0xb8] sm:$0xff]
    %v473 = vld [vmem:[#allocation8 + $0xc0] sm:$0xff]
    %v474 = vld [vmem:[#allocation8 + $0xc8] sm:$0xff]
    %v475 = vld [vmem:[#allocation8 + $0xd0] sm:$0xff]
    %v476 = vld [vmem:[#allocation8 + $0xd8] sm:$0xff]
    %v477 = vld [vmem:[#allocation8 + $0xe0] sm:$0xff]
    %v478 = vld [vmem:[#allocation8 + $0xe8] sm:$0xff]
    %v479 = vld [vmem:[#allocation8 + $0xf0] sm:$0xff]
    %v480 = vld [vmem:[#allocation8 + $0xf8] sm:$0xff]
    %v481 = vld [vmem:[#allocation10] sm:$0x3]
    %v483 = vlaneseq
    %v484 = vshrl.u32 %v483, 7
    %v485 = vsub.s32 0, %v484
    %v486 = vrot.slane %v481, %v485
    %v487 = vlaneseq
    %v488 = vshrl.u32 %v487, 7
    %v489 = vsub.s32 1, %v488
    %v490 = vrot.slane %v481, %v489
    %v525 = vunpack.c.l.b16 %v449
    %v526 = vunpack.c.h.b16 %v449
    %v527 = vunpack.c.l.b16 %v450
    %v528 = vunpack.c.h.b16 %v450
    %v529 = vunpack.c.l.b16 %v451
    %v530 = vunpack.c.h.b16 %v451
    %v531 = vunpack.c.l.b16 %v452
    %v532 = vunpack.c.h.b16 %v452
    %v533 = vunpack.c.l.b16 %v453
    %v534 = vunpack.c.h.b16 %v453
    %v535 = vunpack.c.l.b16 %v454
    %v536 = vunpack.c.h.b16 %v454
    %v537 = vunpack.c.l.b16 %v455
    %v538 = vunpack.c.h.b16 %v455
    %v539 = vunpack.c.l.b16 %v456
    %v540 = vunpack.c.h.b16 %v456
    %v541 = vunpack.c.l.b16 %v457
    %v542 = vunpack.c.h.b16 %v457
    %v543 = vunpack.c.l.b16 %v458
    %v544 = vunpack.c.h.b16 %v458
    %v545 = vunpack.c.l.b16 %v459
    %v546 = vunpack.c.h.b16 %v459
    %v547 = vunpack.c.l.b16 %v460
    %v548 = vunpack.c.h.b16 %v460
    %v549 = vunpack.c.l.b16 %v461
    %v550 = vunpack.c.h.b16 %v461
    %v551 = vunpack.c.l.b16 %v462
    %v552 = vunpack.c.h.b16 %v462
    %v553 = vunpack.c.l.b16 %v463
    %v554 = vunpack.c.h.b16 %v463
    %v555 = vunpack.c.l.b16 %v464
    %v556 = vunpack.c.h.b16 %v464
    %v557 = vunpack.c.l.b16 %v465
    %v558 = vunpack.c.h.b16 %v465
    %v559 = vunpack.c.l.b16 %v466
    %v560 = vunpack.c.h.b16 %v466
    %v561 = vunpack.c.l.b16 %v467
    %v562 = vunpack.c.h.b16 %v467
    %v563 = vunpack.c.l.b16 %v468
    %v564 = vunpack.c.h.b16 %v468
    %v565 = vunpack.c.l.b16 %v469
    %v566 = vunpack.c.h.b16 %v469
    %v567 = vunpack.c.l.b16 %v470
    %v568 = vunpack.c.h.b16 %v470
    %v569 = vunpack.c.l.b16 %v471
    %v570 = vunpack.c.h.b16 %v471
    %v571 = vunpack.c.l.b16 %v472
    %v572 = vunpack.c.h.b16 %v472
    %v573 = vunpack.c.l.b16 %v473
    %v574 = vunpack.c.h.b16 %v473
    %v575 = vunpack.c.l.b16 %v474
    %v576 = vunpack.c.h.b16 %v474
    %v577 = vunpack.c.l.b16 %v475
    %v578 = vunpack.c.h.b16 %v475
    %v579 = vunpack.c.l.b16 %v476
    %v580 = vunpack.c.h.b16 %v476
    %v581 = vunpack.c.l.b16 %v477
    %v582 = vunpack.c.h.b16 %v477
    %v583 = vunpack.c.l.b16 %v478
    %v584 = vunpack.c.h.b16 %v478
    %v585 = vunpack.c.l.b16 %v479
    %v586 = vunpack.c.h.b16 %v479
    %v587 = vunpack.c.l.b16 %v480
    %v588 = vunpack.c.h.b16 %v480
    %v589 = vpack.c.b16 %v527, %v525
    %v590 = vpack.c.b16 %v528, %v526
    %v591 = vpack.c.b16 %v531, %v529
    %v592 = vpack.c.b16 %v532, %v530
    %v593 = vpack.c.b16 %v535, %v533
    %v594 = vpack.c.b16 %v536, %v534
    %v595 = vpack.c.b16 %v539, %v537
    %v596 = vpack.c.b16 %v540, %v538
    %v597 = vpack.c.b16 %v543, %v541
    %v598 = vpack.c.b16 %v544, %v542
    %v599 = vpack.c.b16 %v547, %v545
    %v600 = vpack.c.b16 %v548, %v546
    %v601 = vpack.c.b16 %v551, %v549
    %v602 = vpack.c.b16 %v552, %v550
    %v603 = vpack.c.b16 %v555, %v553
    %v604 = vpack.c.b16 %v556, %v554
    %v605 = vpack.c.b16 %v559, %v557
    %v606 = vpack.c.b16 %v560, %v558
    %v607 = vpack.c.b16 %v563, %v561
    %v608 = vpack.c.b16 %v564, %v562
    %v609 = vpack.c.b16 %v567, %v565
    %v610 = vpack.c.b16 %v568, %v566
    %v611 = vpack.c.b16 %v571, %v569
    %v612 = vpack.c.b16 %v572, %v570
    %v613 = vpack.c.b16 %v575, %v573
    %v614 = vpack.c.b16 %v576, %v574
    %v615 = vpack.c.b16 %v579, %v577
    %v616 = vpack.c.b16 %v580, %v578
    %v617 = vpack.c.b16 %v583, %v581
    %v618 = vpack.c.b16 %v584, %v582
    %v619 = vpack.c.b16 %v587, %v585
    %v620 = vpack.c.b16 %v588, %v586
    %653 = vmatprep.subr.bf16.mxu0 %v590
    %654 = vmatpush1.bf16.msra.mxu0 %v589
    %655 = vmatprep.subr.bf16.mxu0 %v592
    %656 = vmatpush1.bf16.msra.mxu0 %v591
    %657 = vmatprep.subr.bf16.mxu0 %v594
    %658 = vmatpush1.bf16.msra.mxu0 %v593
    %659 = vmatprep.subr.bf16.mxu0 %v596
    %660 = vmatpush1.bf16.msra.mxu0 %v595
    %661 = vmatprep.subr.bf16.mxu0 %v598
    %662 = vmatpush1.bf16.msra.mxu0 %v597
    %663 = vmatprep.subr.bf16.mxu0 %v600
    %664 = vmatpush1.bf16.msra.mxu0 %v599
    %665 = vmatprep.subr.bf16.mxu0 %v602
    %666 = vmatpush1.bf16.msra.mxu0 %v601
    %667 = vmatprep.subr.bf16.mxu0 %v604
    %668 = vmatpush1.bf16.msra.mxu0 %v603
    %669 = vmatprep.subr.bf16.mxu0 %v606
    %670 = vmatpush1.bf16.msra.mxu0 %v605
    %671 = vmatprep.subr.bf16.mxu0 %v608
    %672 = vmatpush1.bf16.msra.mxu0 %v607
    %673 = vmatprep.subr.bf16.mxu0 %v610
    %674 = vmatpush1.bf16.msra.mxu0 %v609
    %675 = vmatprep.subr.bf16.mxu0 %v612
    %676 = vmatpush1.bf16.msra.mxu0 %v611
    %677 = vmatprep.subr.bf16.mxu0 %v614
    %678 = vmatpush1.bf16.msra.mxu0 %v613
    %679 = vmatprep.subr.bf16.mxu0 %v616
    %680 = vmatpush1.bf16.msra.mxu0 %v615
    %681 = vmatprep.subr.bf16.mxu0 %v618
    %682 = vmatpush1.bf16.msra.mxu0 %v617
    %683 = vmatprep.subr.bf16.mxu0 %v620
    %684 = vmatpush1.bf16.msra.mxu0 %v619
    %685 = vmatprep.mubr.bf16.mxu0 %v448
    %686 = vmatmul.mubr.bf16.gmra.mrb[0].mxu0 %v447
    %v687 = vpop.f32.mrb[0].mxu0
    %v688 = vadd.f32 %v486, %v687
    %v689 = vpop.f32.mrb[0].mxu0
    %v690 = vadd.f32 %v490, %v689
    %v691 = vpop.f32.mrb[0].mxu0
    %v692 = vpop.f32.mrb[0].mxu0
    %693 = vdwg.mxu0
    %v694 = vmax.f32 %v688, 0.0
    %v695 = vmax.f32 %v690, 0.0
    %v696 = vpack.c.bf16 %v694, %v694
    %v697 = vpack.c.bf16 %v695, %v695
    %v698 = vld [vmem:[#allocation11] sm:$0xf]
    %v699 = vld [vmem:[#allocation11 + $0x4] sm:$0xf]
    %v700 = vld [vmem:[#allocation11 + $0x8] sm:$0xf]
    %v701 = vld [vmem:[#allocation11 + $0xc] sm:$0xf]
    %v702 = vld [vmem:[#allocation11 + $0x10] sm:$0xf]
    %v703 = vld [vmem:[#allocation11 + $0x14] sm:$0xf]
    %v704 = vld [vmem:[#allocation11 + $0x18] sm:$0xf]
    %v705 = vld [vmem:[#allocation11 + $0x1c] sm:$0xf]
    %v706 = vld [vmem:[#allocation11 + $0x20] sm:$0xf]
    %v707 = vld [vmem:[#allocation11 + $0x24] sm:$0xf]
    %v708 = vld [vmem:[#allocation11 + $0x28] sm:$0xf]
    %v709 = vld [vmem:[#allocation11 + $0x2c] sm:$0xf]
    %v710 = vld [vmem:[#allocation11 + $0x30] sm:$0xf]
    %v711 = vld [vmem:[#allocation11 + $0x34] sm:$0xf]
    %v712 = vld [vmem:[#allocation11 + $0x38] sm:$0xf]
    %v713 = vld [vmem:[#allocation11 + $0x3c] sm:$0xf]
    %v714 = vld [vmem:[#allocation11 + $0x40] sm:$0xf]
    %v715 = vld [vmem:[#allocation11 + $0x44] sm:$0xf]
    %v716 = vld [vmem:[#allocation11 + $0x48] sm:$0xf]
    %v717 = vld [vmem:[#allocation11 + $0x4c] sm:$0xf]
    %v718 = vld [vmem:[#allocation11 + $0x50] sm:$0xf]
    %v719 = vld [vmem:[#allocation11 + $0x54] sm:$0xf]
    %v720 = vld [vmem:[#allocation11 + $0x58] sm:$0xf]
    %v721 = vld [vmem:[#allocation11 + $0x5c] sm:$0xf]
    %v722 = vld [vmem:[#allocation11 + $0x60] sm:$0xf]
    %v723 = vld [vmem:[#allocation11 + $0x64] sm:$0xf]
    %v724 = vld [vmem:[#allocation11 + $0x68] sm:$0xf]
    %v725 = vld [vmem:[#allocation11 + $0x6c] sm:$0xf]
    %v726 = vld [vmem:[#allocation11 + $0x70] sm:$0xf]
    %v727 = vld [vmem:[#allocation11 + $0x74] sm:$0xf]
    %v728 = vld [vmem:[#allocation11 + $0x78] sm:$0xf]
    %v729 = vld [vmem:[#allocation11 + $0x7c] sm:$0xf]
    %v762 = vunpack.c.l.b16 %v698
    %v763 = vunpack.c.l.b16 %v699
    %v764 = vunpack.c.l.b16 %v700
    %v765 = vunpack.c.l.b16 %v701
    %v766 = vunpack.c.l.b16 %v702
    %v767 = vunpack.c.l.b16 %v703
    %v768 = vunpack.c.l.b16 %v704
    %v769 = vunpack.c.l.b16 %v705
    %v770 = vunpack.c.l.b16 %v706
    %v771 = vunpack.c.l.b16 %v707
    %v772 = vunpack.c.l.b16 %v708
    %v773 = vunpack.c.l.b16 %v709
    %v774 = vunpack.c.l.b16 %v710
    %v775 = vunpack.c.l.b16 %v711
    %v776 = vunpack.c.l.b16 %v712
    %v777 = vunpack.c.l.b16 %v713
    %v778 = vunpack.c.l.b16 %v714
    %v779 = vunpack.c.l.b16 %v715
    %v780 = vunpack.c.l.b16 %v716
    %v781 = vunpack.c.l.b16 %v717
    %v782 = vunpack.c.l.b16 %v718
    %v783 = vunpack.c.l.b16 %v719
    %v784 = vunpack.c.l.b16 %v720
    %v785 = vunpack.c.l.b16 %v721
    %v786 = vunpack.c.l.b16 %v722
    %v787 = vunpack.c.l.b16 %v723
    %v788 = vunpack.c.l.b16 %v724
    %v789 = vunpack.c.l.b16 %v725
    %v790 = vunpack.c.l.b16 %v726
    %v791 = vunpack.c.l.b16 %v727
    %v792 = vunpack.c.l.b16 %v728
    %v793 = vunpack.c.l.b16 %v729
    %v794 = vpack.c.b16 %v763, %v762
    %v795 = vpack.c.b16 %v765, %v764
    %v796 = vpack.c.b16 %v767, %v766
    %v797 = vpack.c.b16 %v769, %v768
    %v798 = vpack.c.b16 %v771, %v770
    %v799 = vpack.c.b16 %v773, %v772
    %v800 = vpack.c.b16 %v775, %v774
    %v801 = vpack.c.b16 %v777, %v776
    %v802 = vpack.c.b16 %v779, %v778
    %v803 = vpack.c.b16 %v781, %v780
    %v804 = vpack.c.b16 %v783, %v782
    %v805 = vpack.c.b16 %v785, %v784
    %v806 = vpack.c.b16 %v787, %v786
    %v807 = vpack.c.b16 %v789, %v788
    %v808 = vpack.c.b16 %v791, %v790
    %v809 = vpack.c.b16 %v793, %v792
    %826 = vmatprep.subr.bf16.mxu0 0
    %827 = vmatpush1.bf16.msra.mxu0 %v794
    %828 = vmatprep.subr.bf16.mxu0 0
    %829 = vmatpush1.bf16.msra.mxu0 %v795
    %830 = vmatprep.subr.bf16.mxu0 0
    %831 = vmatpush1.bf16.msra.mxu0 %v796
    %832 = vmatprep.subr.bf16.mxu0 0
    %833 = vmatpush1.bf16.msra.mxu0 %v797
    %834 = vmatprep.subr.bf16.mxu0 0
    %835 = vmatpush1.bf16.msra.mxu0 %v798
    %836 = vmatprep.subr.bf16.mxu0 0
    %837 = vmatpush1.bf16.msra.mxu0 %v799
    %838 = vmatprep.subr.bf16.mxu0 0
    %839 = vmatpush1.bf16.msra.mxu0 %v800
    %840 = vmatprep.subr.bf16.mxu0 0
    %841 = vmatpush1.bf16.msra.mxu0 %v801
    %842 = vmatprep.subr.bf16.mxu0 0
    %843 = vmatpush1.bf16.msra.mxu0 %v802
    %844 = vmatprep.subr.bf16.mxu0 0
    %845 = vmatpush1.bf16.msra.mxu0 %v803
    %846 = vmatprep.subr.bf16.mxu0 0
    %847 = vmatpush1.bf16.msra.mxu0 %v804
    %848 = vmatprep.subr.bf16.mxu0 0
    %849 = vmatpush1.bf16.msra.mxu0 %v805
    %850 = vmatprep.subr.bf16.mxu0 0
    %851 = vmatpush1.bf16.msra.mxu0 %v806
    %852 = vmatprep.subr.bf16.mxu0 0
    %853 = vmatpush1.bf16.msra.mxu0 %v807
    %854 = vmatprep.subr.bf16.mxu0 0
    %855 = vmatpush1.bf16.msra.mxu0 %v808
    %856 = vmatprep.subr.bf16.mxu0 0
    %857 = vmatpush1.bf16.msra.mxu0 %v809
    %858 = vmatprep.mubr.bf16.mxu0 %v697
    %859 = vmatmul.mubr.bf16.gmra.mrb[0].mxu0 %v696
    %v860 = vpop.f32.mrb[0].mxu0
    %v861 = vadd.f32 0.0, %v860
    %v862 = vpop.f32.mrb[0].mxu0
    %v863 = vpop.f32.mrb[0].mxu0
    %v864 = vpop.f32.mrb[0].mxu0
    %865 = vdwg.mxu0
    %v866 = vld [vmem:[#allocation13] sm:$0x1]
    %v868 = vlaneseq
    %v869 = vshrl.u32 %v868, 7
    %v870 = vsub.s32 0, %v869
    %v871 = vrot.slane %v866, %v870
    %v873 = vadd.f32 %v861, %v871
    %vm874 = vcmask 15360
    %875 = vst.msk [vmem:[%s9] sm:$0xff] %vm874, %v873
    // Predicated region
    $region66: #{regression_model_forward.1} parent=1 // pred_check
      _
    $region67: #{regression_model_forward.1} parent=1 // pred_check_branch
      %877 = sbr.rel (0) target = $region69
    $region68: #{regression_model_forward.1} parent=1 // pred_region
      _
    $region69: #{regression_model_forward.1} parent=1 // pred_fallthru
      _
    // Predicated region
    $region70: #{regression_model_forward.1} parent=1 // pred_check
      _
    $region71: #{regression_model_forward.1} parent=1 // pred_check_branch
      %879 = sbr.rel (0) target = $region73
    $region72: #{regression_model_forward.1} parent=1 // pred_region
      _
    $region73: #{regression_model_forward.1} parent=1 // pred_fallthru
      _
    %880 = vsyncpa [#allocation4], 1
    %881 = vsyncpa [#allocation6], 1
    %882 = vsyncpa [#allocation9], 1
    %883 = vsyncpa [#allocation12], 1

</llo_original>
